<compile_context>
chip_gen: v5e
topology: v5e:2x2
jax: 0.10.0
libtpu: 0.0.40
codegen_flags: <defaults>
</compile_context>

<pallas_src>
import functools

import jax
import jax.numpy as jnp
from jax import lax
from jax.experimental import pallas as pl
from jax.experimental.pallas import tpu as pltpu

LN_EPS = 1e-5


def _round_up(x, m):
    return (x + m - 1) // m * m


def mlp_block_kernel(x_ref, ln1w_ref, ln1b_ref, ln2w_ref, ln2b_ref,
                     w1_ref, b1_ref, w2_ref, b2_ref, o_ref,
                     *, d_real, d_pad):
    x = x_ref[...].astype(jnp.float32)

    # Hoist small parameter loads (single f32 rows each).
    ln1w = ln1w_ref[...]
    ln1b = ln1b_ref[...]
    ln2w = ln2w_ref[...]
    ln2b = ln2b_ref[...]
    b1 = b1_ref[...]
    b2 = b2_ref[...]

    inv_d = jnp.float32(1.0 / d_real)
    if d_pad != d_real:
        lane = lax.broadcasted_iota(jnp.int32, (1, d_pad), 1)
        lane_mask = (lane < d_real).astype(jnp.float32)
    else:
        lane_mask = None

    def layernorm(v, w, b):
        # Inputs are zero in padded lanes, so the plain sum is the real sum.
        mu = jnp.sum(v, axis=-1, keepdims=True) * inv_d
        diff = v - mu
        if lane_mask is not None:
            diff = diff * lane_mask            # kill padded lanes before var
        var = jnp.sum(diff * diff, axis=-1, keepdims=True) * inv_d
        # Padded lanes: diff==0 and w==b==0 there -> output stays 0.
        return diff * lax.rsqrt(var + LN_EPS) * w + b

    # norm1: becomes the residual stream.
    x1 = layernorm(x, ln1w, ln1b)
    # norm2 feeding the feed-forward block.
    xn = layernorm(x1, ln2w, ln2b)

    # Feed-forward: bf16 operands on the MXU, f32 accumulation.
    h = jnp.dot(xn.astype(jnp.bfloat16), w1_ref[...],
                preferred_element_type=jnp.float32) + b1
    h = jnp.maximum(h, 0.0)
    ff = jnp.dot(h.astype(jnp.bfloat16), w2_ref[...],
                 preferred_element_type=jnp.float32) + b2

    o_ref[...] = (x1 + ff).astype(o_ref.dtype)


def mlp_block_forward(src, params, *, tile_rows=256):
    """src: (B, S, D) float32. Returns (B, S, D)."""
    B, S, D = src.shape
    F = params["w1"].shape[1]
    rows = B * S

    # Lane-align feature dims.
    D_pad = _round_up(D, 128)
    F_pad = _round_up(F, 128)

    # Row tile: multiple of 8, clamped to (padded) row count; pad rows to it.
    tile_rows = max(8, min(tile_rows, _round_up(rows, 8)))
    tile_rows = _round_up(tile_rows, 8)
    rows_pad = _round_up(rows, tile_rows)
    num_tiles = rows_pad // tile_rows

    x2d = src.reshape(rows, D).astype(jnp.float32)
    x2d = jnp.pad(x2d, ((0, rows_pad - rows), (0, D_pad - D)))

    def pad2(a, r, c, dtype):
        a = jnp.asarray(a, jnp.float32)
        a = jnp.pad(a, ((0, r - a.shape[0]), (0, c - a.shape[1])))
        return a.astype(dtype)

    ln1_w = pad2(params["ln1_w"], 1, D_pad, jnp.float32)
    ln1_b = pad2(params["ln1_b"], 1, D_pad, jnp.float32)
    ln2_w = pad2(params["ln2_w"], 1, D_pad, jnp.float32)
    ln2_b = pad2(params["ln2_b"], 1, D_pad, jnp.float32)
    w1 = pad2(params["w1"], D_pad, F_pad, jnp.bfloat16)   # (in, out), bf16 in VMEM
    b1 = pad2(params["b1"], 1, F_pad, jnp.float32)
    w2 = pad2(params["w2"], F_pad, D_pad, jnp.bfloat16)
    b2 = pad2(params["b2"], 1, D_pad, jnp.float32)

    # VMEM budget: double-buffered x/out tiles + double-buffered bf16 weights
    # + vectors + f32 hidden intermediate, with 2x headroom, capped at 64 MiB
    # (physical per-TC VMEM on v7x).
    tile_io = tile_rows * D_pad * 4
    weight_bytes = 2 * D_pad * F_pad * 2
    vec_bytes = (6 * D_pad + 2 * F_pad) * 4
    hidden_bytes = tile_rows * F_pad * 4
    needed = 2 * (2 * tile_io) + 2 * weight_bytes + vec_bytes + 2 * hidden_bytes
    vmem_limit = min(max(2 * needed, 32 * 1024 * 1024), 64 * 1024 * 1024)

    def const_spec(shape):
        return pl.BlockSpec(shape, lambda i: (0, 0))

    kernel = functools.partial(mlp_block_kernel, d_real=D, d_pad=D_pad)

    out = pl.pallas_call(
        kernel,
        out_shape=jax.ShapeDtypeStruct((rows_pad, D_pad), src.dtype),
        grid_spec=pltpu.PrefetchScalarGridSpec(
            num_scalar_prefetch=0,
            grid=(num_tiles,),
            in_specs=[
                pl.BlockSpec((tile_rows, D_pad), lambda i: (i, 0)),  # x rows
                const_spec((1, D_pad)),   # ln1 weight
                const_spec((1, D_pad)),   # ln1 bias
                const_spec((1, D_pad)),   # ln2 weight
                const_spec((1, D_pad)),   # ln2 bias
                const_spec((D_pad, F_pad)),  # linear1 weight (in, out) bf16
                const_spec((1, F_pad)),      # linear1 bias
                const_spec((F_pad, D_pad)),  # linear2 weight (in, out) bf16
                const_spec((1, D_pad)),      # linear2 bias
            ],
            out_specs=pl.BlockSpec((tile_rows, D_pad), lambda i: (i, 0)),
        ),
        compiler_params=pltpu.CompilerParams(
            dimension_semantics=("parallel",),
            vmem_limit_bytes=vmem_limit,
        ),
    )(x2d, ln1_w, ln1_b, ln2_w, ln2_b, w1, b1, w2, b2)

    return out[:rows, :D].reshape(B, S, D)


def init_params(key, d_model, dim_feedforward):
    k1, k2, k3, k4 = jax.random.split(key, 4)
    # nn.Linear default init: U(-1/sqrt(fan_in), 1/sqrt(fan_in))
    lim1 = 1.0 / (d_model ** 0.5)
    lim2 = 1.0 / (dim_feedforward ** 0.5)
    return {
        # LayerNorm affine params (PyTorch init: weight=1, bias=0)
        "ln1_w": jnp.ones((1, d_model), jnp.float32),
        "ln1_b": jnp.zeros((1, d_model), jnp.float32),
        "ln2_w": jnp.ones((1, d_model), jnp.float32),
        "ln2_b": jnp.zeros((1, d_model), jnp.float32),
        # linear1: d_model -> dim_feedforward (stored as (in, out))
        "w1": jax.random.uniform(k1, (d_model, dim_feedforward), jnp.float32, -lim1, lim1),
        "b1": jax.random.uniform(k2, (1, dim_feedforward), jnp.float32, -lim1, lim1),
        # linear2: dim_feedforward -> d_model
        "w2": jax.random.uniform(k3, (dim_feedforward, d_model), jnp.float32, -lim2, lim2),
        "b2": jax.random.uniform(k4, (1, d_model), jnp.float32, -lim2, lim2),
    }


def reference_forward(src, params):
    """Pure-JAX f32 reference of the PyTorch MlpBlock.forward (norm_first=True)."""
    def ln(x, w, b):
        mu = jnp.mean(x, -1, keepdims=True)
        var = jnp.mean((x - mu) ** 2, -1, keepdims=True)
        return (x - mu) / jnp.sqrt(var + LN_EPS) * w[0] + b[0]

    x1 = ln(src, params["ln1_w"], params["ln1_b"])
    xn = ln(x1, params["ln2_w"], params["ln2_b"])
    h = jnp.maximum(xn @ params["w1"] + params["b1"][0], 0.0)
    ff = h @ params["w2"] + params["b2"][0]
    return x1 + ff


if __name__ == "__main__":
    key = jax.random.PRNGKey(0)

    # Test 1: small module-consistent shapes (exercises D/F lane padding).
    B, S, D, FF = 2, 8, 32, 64  # batch, seq, d_model, dim_feedforward
    kx, kp, kx2, kp2 = jax.random.split(key, 4)
    src = jax.random.normal(kx, (B, S, D), jnp.float32)
    params = init_params(kp, D, FF)

    out = jax.block_until_ready(mlp_block_forward(src, params))
    ref = reference_forward(src, params)
    assert out.shape == (B, S, D)
    # bf16 matmul operands -> looser tolerance than pure f32.
    assert jnp.allclose(out, ref, atol=3e-2, rtol=3e-2), "mismatch vs reference (test 1)"

    # Test 2: non-divisible row count with a multi-step grid (row padding path).
    B2, S2, D2, FF2 = 3, 50, 48, 96
    src2 = jax.random.normal(kx2, (B2, S2, D2), jnp.float32)
    params2 = init_params(kp2, D2, FF2)
    out2 = jax.block_until_ready(mlp_block_forward(src2, params2, tile_rows=64))
    ref2 = reference_forward(src2, params2)
    assert out2.shape == (B2, S2, D2)
    assert jnp.allclose(out2, ref2, atol=3e-2, rtol=3e-2), "mismatch vs reference (test 2)"

    print("KERNEL_OK")
</pallas_src>

<mosaic_0001>
module attributes {stable_mosaic.version = 11 : i64} {
  func.func @mlp_block_kernel(%arg0: i32, %arg1: memref<16x128xf32, #tpu.memory_space<vmem>>, %arg2: memref<1x128xf32, #tpu.memory_space<vmem>>, %arg3: memref<1x128xf32, #tpu.memory_space<vmem>>, %arg4: memref<1x128xf32, #tpu.memory_space<vmem>>, %arg5: memref<1x128xf32, #tpu.memory_space<vmem>>, %arg6: memref<128x128xbf16, #tpu.memory_space<vmem>>, %arg7: memref<1x128xf32, #tpu.memory_space<vmem>>, %arg8: memref<128x128xbf16, #tpu.memory_space<vmem>>, %arg9: memref<1x128xf32, #tpu.memory_space<vmem>>, %arg10: memref<16x128xf32, #tpu.memory_space<vmem>>) attributes {dimension_semantics = [#tpu.dimension_semantics<parallel>], iteration_bounds = array<i64: 1>, scalar_prefetch = 0 : i64, scratch_operands = 0 : i64, tpu.core_type = #tpu.core_type<tc>, window_params = [{transform_indices = @transform_0, window_bounds = array<i64: 16, 128>}, {pipeline_mode = #tpu.pipeline_mode<synchronous>, transform_indices = @transform_1, window_bounds = array<i64: 1, 128>}, {pipeline_mode = #tpu.pipeline_mode<synchronous>, transform_indices = @transform_2, window_bounds = array<i64: 1, 128>}, {pipeline_mode = #tpu.pipeline_mode<synchronous>, transform_indices = @transform_3, window_bounds = array<i64: 1, 128>}, {pipeline_mode = #tpu.pipeline_mode<synchronous>, transform_indices = @transform_4, window_bounds = array<i64: 1, 128>}, {pipeline_mode = #tpu.pipeline_mode<synchronous>, transform_indices = @transform_5, window_bounds = array<i64: 128, 128>}, {pipeline_mode = #tpu.pipeline_mode<synchronous>, transform_indices = @transform_6, window_bounds = array<i64: 1, 128>}, {pipeline_mode = #tpu.pipeline_mode<synchronous>, transform_indices = @transform_7, window_bounds = array<i64: 128, 128>}, {pipeline_mode = #tpu.pipeline_mode<synchronous>, transform_indices = @transform_8, window_bounds = array<i64: 1, 128>}, {transform_indices = @transform_9, window_bounds = array<i64: 16, 128>}]} {
    %c0 = arith.constant 0 : index
    %c0_0 = arith.constant 0 : index
    %0 = vector.load %arg1[%c0, %c0_0] : memref<16x128xf32, #tpu.memory_space<vmem>>, vector<16x128xf32>
    %c0_1 = arith.constant 0 : index
    %c0_2 = arith.constant 0 : index
    %1 = vector.load %arg2[%c0_1, %c0_2] : memref<1x128xf32, #tpu.memory_space<vmem>>, vector<1x128xf32>
    %c0_3 = arith.constant 0 : index
    %c0_4 = arith.constant 0 : index
    %2 = vector.load %arg3[%c0_3, %c0_4] : memref<1x128xf32, #tpu.memory_space<vmem>>, vector<1x128xf32>
    %c0_5 = arith.constant 0 : index
    %c0_6 = arith.constant 0 : index
    %3 = vector.load %arg4[%c0_5, %c0_6] : memref<1x128xf32, #tpu.memory_space<vmem>>, vector<1x128xf32>
    %c0_7 = arith.constant 0 : index
    %c0_8 = arith.constant 0 : index
    %4 = vector.load %arg5[%c0_7, %c0_8] : memref<1x128xf32, #tpu.memory_space<vmem>>, vector<1x128xf32>
    %c0_9 = arith.constant 0 : index
    %c0_10 = arith.constant 0 : index
    %5 = vector.load %arg7[%c0_9, %c0_10] : memref<1x128xf32, #tpu.memory_space<vmem>>, vector<1x128xf32>
    %c0_11 = arith.constant 0 : index
    %c0_12 = arith.constant 0 : index
    %6 = vector.load %arg9[%c0_11, %c0_12] : memref<1x128xf32, #tpu.memory_space<vmem>>, vector<1x128xf32>
    %7 = tpu.iota {dimensions = array<i32: 1>} : vector<1x128xi32>
    %c32_i32 = arith.constant 32 : i32
    %8 = vector.broadcast %c32_i32 : i32 to vector<1x128xi32>
    %9 = arith.cmpi slt, %7, %8 : vector<1x128xi32>
    %10 = arith.extui %9 : vector<1x128xi1> to vector<1x128xi32>
    %11 = arith.sitofp %10 : vector<1x128xi32> to vector<1x128xf32>
    %cst = arith.constant dense<0.000000e+00> : vector<16xf32>
    %12 = vector.multi_reduction <add>, %0, %cst [1] : vector<16x128xf32> to vector<16xf32>
    %13 = vector.shape_cast %12 : vector<16xf32> to vector<16x1xf32>
    %cst_13 = arith.constant 3.125000e-02 : f32
    %14 = vector.broadcast %cst_13 : f32 to vector<16x1xf32>
    %15 = arith.mulf %13, %14 : vector<16x1xf32>
    %16 = vector.broadcast %15 : vector<16x1xf32> to vector<16x128xf32>
    %17 = arith.subf %0, %16 : vector<16x128xf32>
    %18 = vector.broadcast %11 : vector<1x128xf32> to vector<16x128xf32>
    %19 = arith.mulf %17, %18 : vector<16x128xf32>
    %20 = arith.mulf %19, %19 : vector<16x128xf32>
    %cst_14 = arith.constant dense<0.000000e+00> : vector<16xf32>
    %21 = vector.multi_reduction <add>, %20, %cst_14 [1] : vector<16x128xf32> to vector<16xf32>
    %22 = vector.shape_cast %21 : vector<16xf32> to vector<16x1xf32>
    %cst_15 = arith.constant 3.125000e-02 : f32
    %23 = vector.broadcast %cst_15 : f32 to vector<16x1xf32>
    %24 = arith.mulf %22, %23 : vector<16x1xf32>
    %cst_16 = arith.constant 9.99999974E-6 : f32
    %25 = vector.broadcast %cst_16 : f32 to vector<16x1xf32>
    %26 = arith.addf %24, %25 : vector<16x1xf32>
    %27 = math.rsqrt %26 : vector<16x1xf32>
    %28 = vector.broadcast %27 : vector<16x1xf32> to vector<16x128xf32>
    %29 = arith.mulf %19, %28 : vector<16x128xf32>
    %30 = vector.broadcast %1 : vector<1x128xf32> to vector<16x128xf32>
    %31 = arith.mulf %29, %30 : vector<16x128xf32>
    %32 = vector.broadcast %2 : vector<1x128xf32> to vector<16x128xf32>
    %33 = arith.addf %31, %32 : vector<16x128xf32>
    %cst_17 = arith.constant dense<0.000000e+00> : vector<16xf32>
    %34 = vector.multi_reduction <add>, %33, %cst_17 [1] : vector<16x128xf32> to vector<16xf32>
    %35 = vector.shape_cast %34 : vector<16xf32> to vector<16x1xf32>
    %cst_18 = arith.constant 3.125000e-02 : f32
    %36 = vector.broadcast %cst_18 : f32 to vector<16x1xf32>
    %37 = arith.mulf %35, %36 : vector<16x1xf32>
    %38 = vector.broadcast %37 : vector<16x1xf32> to vector<16x128xf32>
    %39 = arith.subf %33, %38 : vector<16x128xf32>
    %40 = vector.broadcast %11 : vector<1x128xf32> to vector<16x128xf32>
    %41 = arith.mulf %39, %40 : vector<16x128xf32>
    %42 = arith.mulf %41, %41 : vector<16x128xf32>
    %cst_19 = arith.constant dense<0.000000e+00> : vector<16xf32>
    %43 = vector.multi_reduction <add>, %42, %cst_19 [1] : vector<16x128xf32> to vector<16xf32>
    %44 = vector.shape_cast %43 : vector<16xf32> to vector<16x1xf32>
    %cst_20 = arith.constant 3.125000e-02 : f32
    %45 = vector.broadcast %cst_20 : f32 to vector<16x1xf32>
    %46 = arith.mulf %44, %45 : vector<16x1xf32>
    %cst_21 = arith.constant 9.99999974E-6 : f32
    %47 = vector.broadcast %cst_21 : f32 to vector<16x1xf32>
    %48 = arith.addf %46, %47 : vector<16x1xf32>
    %49 = math.rsqrt %48 : vector<16x1xf32>
    %50 = vector.broadcast %49 : vector<16x1xf32> to vector<16x128xf32>
    %51 = arith.mulf %41, %50 : vector<16x128xf32>
    %52 = vector.broadcast %3 : vector<1x128xf32> to vector<16x128xf32>
    %53 = arith.mulf %51, %52 : vector<16x128xf32>
    %54 = vector.broadcast %4 : vector<1x128xf32> to vector<16x128xf32>
    %55 = arith.addf %53, %54 : vector<16x128xf32>
    %56 = arith.truncf %55 : vector<16x128xf32> to vector<16x128xbf16>
    %c0_22 = arith.constant 0 : index
    %c0_23 = arith.constant 0 : index
    %57 = vector.load %arg6[%c0_22, %c0_23] : memref<128x128xbf16, #tpu.memory_space<vmem>>, vector<128x128xbf16>
    %cst_24 = arith.constant dense<0.000000e+00> : vector<16x128xf32>
    %58 = tpu.matmul %56, %57, %cst_24 {dimension_numbers = #tpu.dot_dimension_numbers<[1], [0], [0], [1], [0, 0, 1, 1], [], []>} : vector<16x128xbf16>, vector<128x128xbf16>, vector<16x128xf32> -> vector<16x128xf32>
    %59 = vector.broadcast %5 : vector<1x128xf32> to vector<16x128xf32>
    %60 = arith.addf %58, %59 : vector<16x128xf32>
    %cst_25 = arith.constant 0.000000e+00 : f32
    %61 = vector.broadcast %cst_25 : f32 to vector<16x128xf32>
    %62 = arith.maximumf %60, %61 : vector<16x128xf32>
    %63 = arith.truncf %62 : vector<16x128xf32> to vector<16x128xbf16>
    %c0_26 = arith.constant 0 : index
    %c0_27 = arith.constant 0 : index
    %64 = vector.load %arg8[%c0_26, %c0_27] : memref<128x128xbf16, #tpu.memory_space<vmem>>, vector<128x128xbf16>
    %cst_28 = arith.constant dense<0.000000e+00> : vector<16x128xf32>
    %65 = tpu.matmul %63, %64, %cst_28 {dimension_numbers = #tpu.dot_dimension_numbers<[1], [0], [0], [1], [0, 0, 1, 1], [], []>} : vector<16x128xbf16>, vector<128x128xbf16>, vector<16x128xf32> -> vector<16x128xf32>
    %66 = vector.broadcast %6 : vector<1x128xf32> to vector<16x128xf32>
    %67 = arith.addf %65, %66 : vector<16x128xf32>
    %68 = arith.addf %33, %67 : vector<16x128xf32>
    %c0_29 = arith.constant 0 : index
    %c0_30 = arith.constant 0 : index
    %69 = vector.load %arg10[%c0_29, %c0_30] : memref<16x128xf32, #tpu.memory_space<vmem>>, vector<16x128xf32>
    tpu.vector_store %arg10[%c0_29, %c0_30], %68 {strides = array<i32>} : memref<16x128xf32, #tpu.memory_space<vmem>>, vector<16x128xf32>,
    return
  }
  func.func @transform_0(%arg0: i32) -> (i32, i32) {
    %c0_i32 = arith.constant 0 : i32
    %c0_i32_0 = arith.constant 0 : i32
    return %arg0, %c0_i32 : i32, i32
  }
  func.func @transform_1(%arg0: i32) -> (i32, i32) {
    %c0_i32 = arith.constant 0 : i32
    %c0_i32_0 = arith.constant 0 : i32
    %c0_i32_1 = arith.constant 0 : i32
    return %c0_i32, %c0_i32_0 : i32, i32
  }
  func.func @transform_2(%arg0: i32) -> (i32, i32) {
    %c0_i32 = arith.constant 0 : i32
    %c0_i32_0 = arith.constant 0 : i32
    %c0_i32_1 = arith.constant 0 : i32
    return %c0_i32, %c0_i32_0 : i32, i32
  }
  func.func @transform_3(%arg0: i32) -> (i32, i32) {
    %c0_i32 = arith.constant 0 : i32
    %c0_i32_0 = arith.constant 0 : i32
    %c0_i32_1 = arith.constant 0 : i32
    return %c0_i32, %c0_i32_0 : i32, i32
  }
  func.func @transform_4(%arg0: i32) -> (i32, i32) {
    %c0_i32 = arith.constant 0 : i32
    %c0_i32_0 = arith.constant 0 : i32
    %c0_i32_1 = arith.constant 0 : i32
    return %c0_i32, %c0_i32_0 : i32, i32
  }
  func.func @transform_5(%arg0: i32) -> (i32, i32) {
    %c0_i32 = arith.constant 0 : i32
    %c0_i32_0 = arith.constant 0 : i32
    %c0_i32_1 = arith.constant 0 : i32
    return %c0_i32, %c0_i32_0 : i32, i32
  }
  func.func @transform_6(%arg0: i32) -> (i32, i32) {
    %c0_i32 = arith.constant 0 : i32
    %c0_i32_0 = arith.constant 0 : i32
    %c0_i32_1 = arith.constant 0 : i32
    return %c0_i32, %c0_i32_0 : i32, i32
  }
  func.func @transform_7(%arg0: i32) -> (i32, i32) {
    %c0_i32 = arith.constant 0 : i32
    %c0_i32_0 = arith.constant 0 : i32
    %c0_i32_1 = arith.constant 0 : i32
    return %c0_i32, %c0_i32_0 : i32, i32
  }
  func.func @transform_8(%arg0: i32) -> (i32, i32) {
    %c0_i32 = arith.constant 0 : i32
    %c0_i32_0 = arith.constant 0 : i32
    %c0_i32_1 = arith.constant 0 : i32
    return %c0_i32, %c0_i32_0 : i32, i32
  }
  func.func @transform_9(%arg0: i32) -> (i32, i32) {
    %c0_i32 = arith.constant 0 : i32
    %c0_i32_0 = arith.constant 0 : i32
    return %arg0, %c0_i32 : i32, i32
  }
}

</mosaic_0001>

<llo_original>
// kernel: tpu_custom_call.1
$region0: #{tpu_custom_call.1}
  #allocation0 [shape = 'u32[]', space=smem, size = 0x4, offset = 0x4, fixed_abs, tag = 'smem constant byte address 0x4 - core index']
  #allocation1 [shape = 'u32[72,128]{1,0:T(1,128)}', space=vmem, size = 0x9000, scoped, tag = 'internal scratch']
  %s0 = inlined_call_operand.hbm [shape: f32[16,128], index: 0, kind: input, shape index: {}]
  %s1 = inlined_call_operand.hbm [shape: f32[1,128], index: 1, kind: input, shape index: {}]
  %s2 = inlined_call_operand.vmem [shape: f32[1,128], index: 2, kind: input, shape index: {}]
  %s3 = inlined_call_operand.vmem [shape: f32[1,128], index: 3, kind: input, shape index: {}]
  %s4 = inlined_call_operand.vmem [shape: f32[1,128], index: 4, kind: input, shape index: {}]
  %s5 = inlined_call_operand.hbm [shape: bf16[128,128], index: 5, kind: input, shape index: {}]
  %s6 = inlined_call_operand.vmem [shape: f32[1,128], index: 6, kind: input, shape index: {}]
  %s7 = inlined_call_operand.hbm [shape: bf16[128,128], index: 7, kind: input, shape index: {}]
  %s8 = inlined_call_operand.vmem [shape: f32[1,128], index: 8, kind: input, shape index: {}]
  %s9 = inlined_call_operand.hbm [shape: f32[16,128], index: 9, kind: output, shape index: {}]
  %s10 = sld [smem:[#allocation0]]
  $region62: #{tpu_custom_call.1} parent=0
    _
  %s12 = ssub.s32 1, %s10
  %s13 = scalar_select 0, %s12, %s10
  $region1: #{tpu_custom_call.1} parent=0
    #allocation2 [shape = 'u8[8192]{0}', space=vmem, size = 0x2000, scoped, tag = 'input window, operand 0, single buffered']
    #allocation3 [shape = 's32[1]{0}', space=sflag, size = 0x4, scoped, tag = 'scoped memory for tpu_custom_call.1']
    #allocation4 [shape = 's32[1]{0}', space=sflag, size = 0x4, scoped, tag = 'scoped memory for tpu_custom_call.1']
    #allocation5 [shape = 'u8[512]{0}', space=vmem, size = 0x400, scoped, tag = 'input window, operand 1, single buffered']
    #allocation6 [shape = 's32[1]{0}', space=sflag, size = 0x4, scoped, tag = 'scoped memory for tpu_custom_call.1']
    #allocation7 [shape = 'u8[32768]{0}', space=vmem, size = 0x8000, scoped, tag = 'input window, operand 5, single buffered']
    #allocation8 [shape = 'u8[32768]{0}', space=vmem, size = 0x8000, scoped, tag = 'input window, operand 7, single buffered']
    #allocation9 [shape = 's32[1]{0}', space=sflag, size = 0x4, scoped, tag = 'scoped memory for tpu_custom_call.1']
    #allocation10 [shape = 'u8[8192]{0}', space=vmem, size = 0x2000, scoped, tag = 'output window, operand 0, single buffered']
    %14 = vsyncpa [#allocation3], 0
    %15 = vsyncpa [#allocation6], 0
    %16 = vsyncpa [#allocation9], 0
    %17 = vsyncpa [#allocation4], 0
    // Predicated region
    $region2: #{tpu_custom_call.1} parent=1 // pred_check
      _
    $region3: #{tpu_custom_call.1} parent=1 // pred_check_branch
      %19 = sbr.rel (0) target = $region5
    $region4: #{tpu_custom_call.1} parent=1 // pred_region
      %21 = vsyncadd [#allocation3], 0
      %s22 = sshll.u32 %s0, 4
      %s23 = int_to_ptr.hbm [resolvable:$true] %s22
      %s24 = sshll.u32 [#allocation2], 4
      %s25 = int_to_ptr.vmem [resolvable:$true] %s24
      %30 = dma.hbm_to_vmem [thread:$0]  %s23, 256, %s25, [#allocation3], 128, 128, 8
    $region5: #{tpu_custom_call.1} parent=1 // pred_fallthru
      _
    // Predicated region
    $region6: #{tpu_custom_call.1} parent=1 // pred_check
      _
    $region7: #{tpu_custom_call.1} parent=1 // pred_check_branch
      %32 = sbr.rel (0) target = $region9
    $region8: #{tpu_custom_call.1} parent=1 // pred_region
      %34 = vsyncadd [#allocation6], 0
      %s36 = sshll.u32 %s1, 4
      %s37 = int_to_ptr.hbm [resolvable:$true] %s36
      %s38 = sshll.u32 [#allocation5], 4
      %s39 = int_to_ptr.vmem [resolvable:$true] %s38
      %41 = dma.hbm_to_vmem [thread:$0]  %s37, 16, %s39, [#allocation6]
    $region9: #{tpu_custom_call.1} parent=1 // pred_fallthru
      _
    // Predicated region
    $region10: #{tpu_custom_call.1} parent=1 // pred_check
      _
    $region11: #{tpu_custom_call.1} parent=1 // pred_check_branch
      %43 = sbr.rel (0) target = $region13
    $region12: #{tpu_custom_call.1} parent=1 // pred_region
      _
    $region13: #{tpu_custom_call.1} parent=1 // pred_fallthru
      _
    // Predicated region
    $region14: #{tpu_custom_call.1} parent=1 // pred_check
      _
    $region15: #{tpu_custom_call.1} parent=1 // pred_check_branch
      %45 = sbr.rel (0) target = $region17
    $region16: #{tpu_custom_call.1} parent=1 // pred_region
      _
    $region17: #{tpu_custom_call.1} parent=1 // pred_fallthru
      _
    // Predicated region
    $region18: #{tpu_custom_call.1} parent=1 // pred_check
      _
    $region19: #{tpu_custom_call.1} parent=1 // pred_check_branch
      %47 = sbr.rel (0) target = $region21
    $region20: #{tpu_custom_call.1} parent=1 // pred_region
      _
    $region21: #{tpu_custom_call.1} parent=1 // pred_fallthru
      _
    // Predicated region
    $region22: #{tpu_custom_call.1} parent=1 // pred_check
      _
    $region23: #{tpu_custom_call.1} parent=1 // pred_check_branch
      %49 = sbr.rel (0) target = $region25
    $region24: #{tpu_custom_call.1} parent=1 // pred_region
      %51 = vsyncadd [#allocation6], 0
      %s52 = sshll.u32 %s5, 4
      %s53 = int_to_ptr.hbm [resolvable:$true] %s52
      %s54 = sshll.u32 [#allocation7], 4
      %s55 = int_to_ptr.vmem [resolvable:$true] %s54
      %60 = dma.hbm_to_vmem [thread:$0]  %s53, 1024, %s55, [#allocation6], 64, 64, 4
    $region25: #{tpu_custom_call.1} parent=1 // pred_fallthru
      _
    // Predicated region
    $region26: #{tpu_custom_call.1} parent=1 // pred_check
      _
    $region27: #{tpu_custom_call.1} parent=1 // pred_check_branch
      %62 = sbr.rel (0) target = $region29
    $region28: #{tpu_custom_call.1} parent=1 // pred_region
      _
    $region29: #{tpu_custom_call.1} parent=1 // pred_fallthru
      _
    // Predicated region
    $region30: #{tpu_custom_call.1} parent=1 // pred_check
      _
    $region31: #{tpu_custom_call.1} parent=1 // pred_check_branch
      %64 = sbr.rel (0) target = $region33
    $region32: #{tpu_custom_call.1} parent=1 // pred_region
      %66 = vsyncadd [#allocation9], 0
      %s67 = sshll.u32 %s7, 4
      %s68 = int_to_ptr.hbm [resolvable:$true] %s67
      %s69 = sshll.u32 [#allocation8], 4
      %s70 = int_to_ptr.vmem [resolvable:$true] %s69
      %75 = dma.hbm_to_vmem [thread:$0]  %s68, 1024, %s70, [#allocation9], 64, 64, 4
    $region33: #{tpu_custom_call.1} parent=1 // pred_fallthru
      _
    // Predicated region
    $region34: #{tpu_custom_call.1} parent=1 // pred_check
      _
    $region35: #{tpu_custom_call.1} parent=1 // pred_check_branch
      %77 = sbr.rel (0) target = $region37
    $region36: #{tpu_custom_call.1} parent=1 // pred_region
      _
    $region37: #{tpu_custom_call.1} parent=1 // pred_fallthru
      _
    // Predicated region
    $region38: #{tpu_custom_call.1} parent=1 // pred_check
      _
    $region39: #{tpu_custom_call.1} parent=1 // pred_check_branch
      %79 = sbr.rel (0) target = $region41
    $region40: #{tpu_custom_call.1} parent=1 // pred_region
      %81 = dma.done [#allocation3], 256
    $region41: #{tpu_custom_call.1} parent=1 // pred_fallthru
      _
    // Predicated region
    $region42: #{tpu_custom_call.1} parent=1 // pred_check
      _
    $region43: #{tpu_custom_call.1} parent=1 // pred_check_branch
      %83 = sbr.rel (0) target = $region45
    $region44: #{tpu_custom_call.1} parent=1 // pred_region
      %85 = dma.done [#allocation6], 16
    $region45: #{tpu_custom_call.1} parent=1 // pred_fallthru
      _
    // Predicated region
    $region46: #{tpu_custom_call.1} parent=1 // pred_check
      _
    $region47: #{tpu_custom_call.1} parent=1 // pred_check_branch
      %87 = sbr.rel (0) target = $region49
    $region48: #{tpu_custom_call.1} parent=1 // pred_region
      %89 = dma.done [#allocation6], 1024
    $region49: #{tpu_custom_call.1} parent=1 // pred_fallthru
      _
    // Predicated region
    $region50: #{tpu_custom_call.1} parent=1 // pred_check
      _
    $region51: #{tpu_custom_call.1} parent=1 // pred_check_branch
      %91 = sbr.rel (0) target = $region53
    $region52: #{tpu_custom_call.1} parent=1 // pred_region
      %93 = dma.done [#allocation9], 1024
    $region53: #{tpu_custom_call.1} parent=1 // pred_fallthru
      _
    %v94 = vld [vmem:[#allocation2] sm:$0xff]
    %v95 = vld [vmem:[#allocation2 + $0x8] sm:$0xff]
    %v96 = vld [vmem:[#allocation5] sm:$0x1]
    %v97 = vld [vmem:[%s2] sm:$0x1]
    %v98 = vld [vmem:[%s3] sm:$0x1]
    %v99 = vld [vmem:[%s4] sm:$0x1]
    %v100 = vld [vmem:[%s6] sm:$0x1]
    %v101 = vld [vmem:[%s8] sm:$0x1]
    %v102 = vlaneseq
    %v103 = vand.u32 %v102, 127
    %vm104 = vcmp.lt.s32.totalorder %v103, 32
    %v105 = vsel %vm104, 1, 0
    %v106 = vcvt.s32.f32 %v105
    %107 = vadd.xlane.f32.xlu0 %v94
    %v108 = vpop.xlane.xlu0 %107
    %109 = vadd.xlane.f32.xlu0 %v95
    %v110 = vpop.xlane.xlu0 %109
    %v111 = vmul.f32 %v108, 0.03125
    %v112 = vmul.f32 %v110, 0.03125
    %v113 = vsub.f32 %v94, %v111
    %v114 = vsub.f32 %v95, %v112
    %v115 = vmul.f32 %v113, %v106
    %v116 = vmul.f32 %v114, %v106
    %v117 = vmul.f32 %v115, %v115
    %v118 = vmul.f32 %v116, %v116
    %119 = vadd.xlane.f32.xlu0 %v117
    %v120 = vpop.xlane.xlu0 %119
    %121 = vadd.xlane.f32.xlu0 %v118
    %v122 = vpop.xlane.xlu0 %121
    %v123 = vmul.f32 %v120, 0.03125
    %v124 = vmul.f32 %v122, 0.03125
    %v125 = vadd.f32 %v123, 1e-05
    %v126 = vadd.f32 %v124, 1e-05
    %v127 = vrsqrt.pop %v125
    %v128 = vmul.f32 %v127, %v125
    %v129 = vmul.f32 %v128, %v127
    %v130 = vmul.f32 0.5, %v129
    %v131 = vsub.f32 1.5, %v130
    %v132 = vmul.f32 %v127, %v131
    %vm133 = vweird.f32 %v125
    %vm134 = vweird.f32 %v127
    %vm135 = vmor %vm133, %vm134
    %v136 = vsel %vm135, %v127, %v132
    %v137 = vrsqrt.pop %v126
    %v138 = vmul.f32 %v137, %v126
    %v139 = vmul.f32 %v138, %v137
    %v140 = vmul.f32 0.5, %v139
    %v141 = vsub.f32 1.5, %v140
    %v142 = vmul.f32 %v137, %v141
    %vm143 = vweird.f32 %v126
    %vm144 = vweird.f32 %v137
    %vm145 = vmor %vm143, %vm144
    %v146 = vsel %vm145, %v137, %v142
    %v147 = vmul.f32 %v115, %v136
    %v148 = vmul.f32 %v116, %v146
    %v150 = vperm.slane %v96, 0
    %v152 = vmul.f32 %v147, %v150
    %v153 = vmul.f32 %v148, %v150
    %v155 = vperm.slane %v97, 0
    %v157 = vadd.f32 %v152, %v155
    %v158 = vadd.f32 %v153, %v155
    %159 = vadd.xlane.f32.xlu0 %v157
    %v160 = vpop.xlane.xlu0 %159
    %161 = vadd.xlane.f32.xlu0 %v158
    %v162 = vpop.xlane.xlu0 %161
    %v163 = vmul.f32 %v160, 0.03125
    %v164 = vmul.f32 %v162, 0.03125
    %v165 = vsub.f32 %v157, %v163
    %v166 = vsub.f32 %v158, %v164
    %v167 = vmul.f32 %v165, %v106
    %v168 = vmul.f32 %v166, %v106
    %v169 = vmul.f32 %v167, %v167
    %v170 = vmul.f32 %v168, %v168
    %171 = vadd.xlane.f32.xlu0 %v169
    %v172 = vpop.xlane.xlu0 %171
    %173 = vadd.xlane.f32.xlu0 %v170
    %v174 = vpop.xlane.xlu0 %173
    %v175 = vmul.f32 %v172, 0.03125
    %v176 = vmul.f32 %v174, 0.03125
    %v177 = vadd.f32 %v175, 1e-05
    %v178 = vadd.f32 %v176, 1e-05
    %v179 = vrsqrt.pop %v177
    %v180 = vmul.f32 %v179, %v177
    %v181 = vmul.f32 %v180, %v179
    %v182 = vmul.f32 0.5, %v181
    %v183 = vsub.f32 1.5, %v182
    %v184 = vmul.f32 %v179, %v183
    %vm185 = vweird.f32 %v177
    %vm186 = vweird.f32 %v179
    %vm187 = vmor %vm185, %vm186
    %v188 = vsel %vm187, %v179, %v184
    %v189 = vrsqrt.pop %v178
    %v190 = vmul.f32 %v189, %v178
    %v191 = vmul.f32 %v190, %v189
    %v192 = vmul.f32 0.5, %v191
    %v193 = vsub.f32 1.5, %v192
    %v194 = vmul.f32 %v189, %v193
    %vm195 = vweird.f32 %v178
    %vm196 = vweird.f32 %v189
    %vm197 = vmor %vm195, %vm196
    %v198 = vsel %vm197, %v189, %v194
    %v199 = vmul.f32 %v167, %v188
    %v200 = vmul.f32 %v168, %v198
    %v202 = vperm.slane %v98, 0
    %v204 = vmul.f32 %v199, %v202
    %v205 = vmul.f32 %v200, %v202
    %v207 = vperm.slane %v99, 0
    %v209 = vadd.f32 %v204, %v207
    %v210 = vadd.f32 %v205, %v207
    %v211 = vpack.c.bf16 %v210, %v209
    %v212 = vld [vmem:[#allocation7] sm:$0xf]
    %v213 = vld [vmem:[#allocation7 + $0x4] sm:$0xf]
    %v214 = vld [vmem:[#allocation7 + $0x8] sm:$0xf]
    %v215 = vld [vmem:[#allocation7 + $0xc] sm:$0xf]
    %v216 = vld [vmem:[#allocation7 + $0x10] sm:$0xf]
    %v217 = vld [vmem:[#allocation7 + $0x14] sm:$0xf]
    %v218 = vld [vmem:[#allocation7 + $0x18] sm:$0xf]
    %v219 = vld [vmem:[#allocation7 + $0x1c] sm:$0xf]
    %v220 = vld [vmem:[#allocation7 + $0x20] sm:$0xf]
    %v221 = vld [vmem:[#allocation7 + $0x24] sm:$0xf]
    %v222 = vld [vmem:[#allocation7 + $0x28] sm:$0xf]
    %v223 = vld [vmem:[#allocation7 + $0x2c] sm:$0xf]
    %v224 = vld [vmem:[#allocation7 + $0x30] sm:$0xf]
    %v225 = vld [vmem:[#allocation7 + $0x34] sm:$0xf]
    %v226 = vld [vmem:[#allocation7 + $0x38] sm:$0xf]
    %v227 = vld [vmem:[#allocation7 + $0x3c] sm:$0xf]
    %v229 = vperm.slane %v100, 0
    %v247 = vunpack.c.l.b16 %v212
    %v248 = vunpack.c.l.b16 %v213
    %v249 = vunpack.c.l.b16 %v214
    %v250 = vunpack.c.l.b16 %v215
    %v251 = vunpack.c.l.b16 %v216
    %v252 = vunpack.c.l.b16 %v217
    %v253 = vunpack.c.l.b16 %v218
    %v254 = vunpack.c.l.b16 %v219
    %v255 = vunpack.c.l.b16 %v220
    %v256 = vunpack.c.l.b16 %v221
    %v257 = vunpack.c.l.b16 %v222
    %v258 = vunpack.c.l.b16 %v223
    %v259 = vunpack.c.l.b16 %v224
    %v260 = vunpack.c.l.b16 %v225
    %v261 = vunpack.c.l.b16 %v226
    %v262 = vunpack.c.l.b16 %v227
    %v263 = vpack.c.b16 %v248, %v247
    %v264 = vpack.c.b16 %v250, %v249
    %v265 = vpack.c.b16 %v252, %v251
    %v266 = vpack.c.b16 %v254, %v253
    %v267 = vpack.c.b16 %v256, %v255
    %v268 = vpack.c.b16 %v258, %v257
    %v269 = vpack.c.b16 %v260, %v259
    %v270 = vpack.c.b16 %v262, %v261
    %279 = vmatpush.bf16.msra.mxu0 %v270
    %280 = vmatpush.bf16.msra.mxu0 %v269
    %281 = vmatpush.bf16.msra.mxu0 %v268
    %282 = vmatpush.bf16.msra.mxu0 %v267
    %283 = vmatpush.bf16.msra.mxu0 %v266
    %284 = vmatpush.bf16.msra.mxu0 %v265
    %285 = vmatpush.bf16.msra.mxu0 %v264
    %286 = vmatpush.bf16.msra.mxu0 %v263
    %287 = vmatmul.bf16.gmra.mxu0 %v211
    %v288 = vpop.f32.mrf.mxu0
    %v289 = vadd.f32 %v229, %v288
    %v290 = vpop.f32.mrf.mxu0
    %v291 = vadd.f32 %v229, %v290
    %292 = vdwg.mxu0
    %v293 = vmax.f32 %v289, 0.0
    %v294 = vmax.f32 %v291, 0.0
    %v295 = vpack.c.bf16 %v294, %v293
    %v296 = vld [vmem:[#allocation8] sm:$0xf]
    %v297 = vld [vmem:[#allocation8 + $0x4] sm:$0xf]
    %v298 = vld [vmem:[#allocation8 + $0x8] sm:$0xf]
    %v299 = vld [vmem:[#allocation8 + $0xc] sm:$0xf]
    %v300 = vld [vmem:[#allocation8 + $0x10] sm:$0xf]
    %v301 = vld [vmem:[#allocation8 + $0x14] sm:$0xf]
    %v302 = vld [vmem:[#allocation8 + $0x18] sm:$0xf]
    %v303 = vld [vmem:[#allocation8 + $0x1c] sm:$0xf]
    %v304 = vld [vmem:[#allocation8 + $0x20] sm:$0xf]
    %v305 = vld [vmem:[#allocation8 + $0x24] sm:$0xf]
    %v306 = vld [vmem:[#allocation8 + $0x28] sm:$0xf]
    %v307 = vld [vmem:[#allocation8 + $0x2c] sm:$0xf]
    %v308 = vld [vmem:[#allocation8 + $0x30] sm:$0xf]
    %v309 = vld [vmem:[#allocation8 + $0x34] sm:$0xf]
    %v310 = vld [vmem:[#allocation8 + $0x38] sm:$0xf]
    %v311 = vld [vmem:[#allocation8 + $0x3c] sm:$0xf]
    %v313 = vperm.slane %v101, 0
    %v331 = vunpack.c.l.b16 %v296
    %v332 = vunpack.c.l.b16 %v297
    %v333 = vunpack.c.l.b16 %v298
    %v334 = vunpack.c.l.b16 %v299
    %v335 = vunpack.c.l.b16 %v300
    %v336 = vunpack.c.l.b16 %v301
    %v337 = vunpack.c.l.b16 %v302
    %v338 = vunpack.c.l.b16 %v303
    %v339 = vunpack.c.l.b16 %v304
    %v340 = vunpack.c.l.b16 %v305
    %v341 = vunpack.c.l.b16 %v306
    %v342 = vunpack.c.l.b16 %v307
    %v343 = vunpack.c.l.b16 %v308
    %v344 = vunpack.c.l.b16 %v309
    %v345 = vunpack.c.l.b16 %v310
    %v346 = vunpack.c.l.b16 %v311
    %v347 = vpack.c.b16 %v332, %v331
    %v348 = vpack.c.b16 %v334, %v333
    %v349 = vpack.c.b16 %v336, %v335
    %v350 = vpack.c.b16 %v338, %v337
    %v351 = vpack.c.b16 %v340, %v339
    %v352 = vpack.c.b16 %v342, %v341
    %v353 = vpack.c.b16 %v344, %v343
    %v354 = vpack.c.b16 %v346, %v345
    %363 = vmatpush.bf16.msra.mxu0 %v354
    %364 = vmatpush.bf16.msra.mxu0 %v353
    %365 = vmatpush.bf16.msra.mxu0 %v352
    %366 = vmatpush.bf16.msra.mxu0 %v351
    %367 = vmatpush.bf16.msra.mxu0 %v350
    %368 = vmatpush.bf16.msra.mxu0 %v349
    %369 = vmatpush.bf16.msra.mxu0 %v348
    %370 = vmatpush.bf16.msra.mxu0 %v347
    %371 = vmatmul.bf16.gmra.mxu0 %v295
    %v372 = vpop.f32.mrf.mxu0
    %v373 = vadd.f32 %v313, %v372
    %v374 = vpop.f32.mrf.mxu0
    %v375 = vadd.f32 %v313, %v374
    %376 = vdwg.mxu0
    %v377 = vadd.f32 %v157, %v373
    %v378 = vadd.f32 %v158, %v375
    %379 = vst [vmem:[#allocation10] sm:$0xff] %v377
    %380 = vst [vmem:[#allocation10 + $0x8] sm:$0xff] %v378
    // Predicated region
    $region54: #{tpu_custom_call.1} parent=1 // pred_check
      _
    $region55: #{tpu_custom_call.1} parent=1 // pred_check_branch
      %382 = sbr.rel (0) target = $region57
    $region56: #{tpu_custom_call.1} parent=1 // pred_region
      %384 = vsyncadd [#allocation4], 0
      %s385 = sshll.u32 [#allocation10], 4
      %s386 = int_to_ptr.vmem [resolvable:$true] %s385
      %s387 = sshll.u32 %s9, 4
      %s388 = int_to_ptr.hbm [resolvable:$true] %s387
      %393 = dma.vmem_to_hbm [thread:$0]  %s386, 256, %s388, [#allocation4], 128, 128, 8
    $region57: #{tpu_custom_call.1} parent=1 // pred_fallthru
      _
    // Predicated region
    $region58: #{tpu_custom_call.1} parent=1 // pred_check
      _
    $region59: #{tpu_custom_call.1} parent=1 // pred_check_branch
      %395 = sbr.rel (0) target = $region61
    $region60: #{tpu_custom_call.1} parent=1 // pred_region
      %397 = dma.done [#allocation4], 256
    $region61: #{tpu_custom_call.1} parent=1 // pred_fallthru
      _
    %398 = vsyncpa [#allocation3], 1
    %399 = vsyncpa [#allocation6], 1
    %400 = vsyncpa [#allocation9], 1
    %401 = vsyncpa [#allocation4], 1

</llo_original>
